<compile_context>
chip_gen: v5e
topology: v5e:2x2
jax: 0.10.0
libtpu: 0.0.40
codegen_flags: <defaults>
</compile_context>

<pallas_src>
import math
import functools

import numpy as np
import jax
import jax.numpy as jnp
from jax.experimental import pallas as pl
from jax.experimental.pallas import tpu as pltpu

# ----------------------------- model config (defaults of NN.__init__) ---------
NUM_HIDDEN_LAYERS = 3
NEURONS_PER_LAYER = 20
INPUT_DIM = 1
OUTPUT_DIM = 1

DP = 128                               # packed hidden width (sublane axis inside the kernel)
G = DP // NEURONS_PER_LAYER            # 6 network replicas packed block-diagonally
LANE = 128                             # lane granularity of batch tiles
MAX_TBG = 512                          # max lanes per grid step (512 lanes * 6 = 3072 batch rows)


def _round_up(n, m):
    return ((n + m - 1) // m) * m


def _cdiv(a, b):
    return -(-a // b)


# ----------------------------- Pallas kernel ----------------------------------
def mlp_kernel(x_ref, w0e_ref, wmid_ref, bcols_ref, woute_ref, o_ref, *, num_hidden):
    """Whole MLP for one lane-tile of packed batch columns, fully VMEM-resident.

    Transposed / packed layout: sublane axis = 6 x 20 hidden units (block diagonal),
    lane axis = batch.  All layers are MXU matmuls; tanh/bias touch ~94% useful data.

    x_ref     : (8, TB)            rows 0..G-1 hold batch groups, rows G..7 are zero
    w0e_ref   : (DP, 8)            column g holds the W_in column in sublane block g
    wmid_ref  : (H-1, DP, DP)      block-diagonal hidden->hidden weights, (out, in)
    bcols_ref : (DP, >=H+1)        col l (< H) = packed hidden bias l; col H rows 0..G-1 = b_out
    woute_ref : (8, DP)            row g holds the W_out row in sublane block g
    o_ref     : (8, TB)            rows 0..G-1 hold the packed outputs
    """
    x = x_ref[...].astype(jnp.float32)                                   # (8, TB)

    # Layer 0 (Input_Dim == 1): expand each batch group to its sublane block on the MXU.
    h = jnp.tanh(
        jnp.dot(w0e_ref[...], x, preferred_element_type=jnp.float32)
        + bcols_ref[:, 0:1])                                             # (DP, TB)

    # Hidden->hidden layers: block-diagonal (DP, DP) matmuls, weights VMEM-resident.
    for l in range(num_hidden - 1):
        h = jnp.tanh(
            jnp.dot(wmid_ref[l], h, preferred_element_type=jnp.float32)
            + bcols_ref[:, l + 1:l + 2])

    # Output layer (Output_Dim == 1): (8, DP) @ (DP, TB) matmul, lane-dense store.
    y = (jnp.dot(woute_ref[...], h, preferred_element_type=jnp.float32)
         + bcols_ref[0:8, num_hidden:num_hidden + 1])                    # (8, TB)
    o_ref[...] = y.astype(o_ref.dtype)


# ----------------------------- one-time parameter packing ---------------------
def prepare_params(params):
    """Pack torch-layout (out, in) params ONCE into block-diagonal / expansion slabs."""
    (w0, b0) = params[0]
    (wl, bl) = params[-1]
    mids = params[1:-1]
    num_hidden = len(params) - 1
    N = NEURONS_PER_LAYER
    assert num_hidden >= 2, "kernel is specialized for >=2 hidden layers"  # TODO(synk): 1-hidden case
    assert w0.shape == (N, INPUT_DIM) and INPUT_DIM == 1
    assert wl.shape == (OUTPUT_DIM, N) and OUTPUT_DIM == 1
    assert G * N <= DP and G <= 8

    nbc = max(8, num_hidden + 1)
    w0e = np.zeros((DP, 8), np.float32)
    woute = np.zeros((8, DP), np.float32)
    bcols = np.zeros((DP, nbc), np.float32)
    wmid = np.zeros((num_hidden - 1, DP, DP), np.float32)

    w0_col = np.asarray(w0[:, 0], np.float32)
    b0_v = np.asarray(b0, np.float32)
    wl_row = np.asarray(wl[0, :], np.float32)
    mids_np = [(np.asarray(w, np.float32), np.asarray(b, np.float32)) for (w, b) in mids]

    for g in range(G):
        s = g * N
        w0e[s:s + N, g] = w0_col
        woute[g, s:s + N] = wl_row
        bcols[s:s + N, 0] = b0_v
        for l, (w, b) in enumerate(mids_np):
            wmid[l, s:s + N, s:s + N] = w
            bcols[s:s + N, l + 1] = b
        bcols[g, num_hidden] = float(bl[0])

    return (jnp.asarray(w0e), jnp.asarray(wmid), jnp.asarray(bcols), jnp.asarray(woute))


# ----------------------------- forward -----------------------------------------
@jax.jit
def nn_forward(x, w0e, wmid, bcols, woute):
    """x: (B, INPUT_DIM=1) float32 -> (B, OUTPUT_DIM=1) float32."""
    B = x.shape[0]
    nmid = wmid.shape[0]
    num_hidden = nmid + 1
    nbc = bcols.shape[1]

    # --- balanced, lane-dense batch tiling -----------------------------------
    n_g = _cdiv(B, G)                           # lane columns actually needed
    n_min = _round_up(max(n_g, 1), LANE)
    ntiles = max(1, _cdiv(n_min, MAX_TBG))
    if n_min >= 2 * LANE:
        ntiles = max(ntiles, 2)                 # keep both v7x TensorCores busy
    tbg = _round_up(max(_cdiv(n_g, ntiles), 1), LANE)   # balanced tile width (lanes)
    bp_g = ntiles * tbg                         # padded lane columns
    Bp = G * bp_g                               # padded batch rows

    # --- pack batch onto the lane axis, G rows deep (row g holds x[g::G]) ----
    x_flat = jnp.pad(x.reshape(-1).astype(jnp.float32), (0, Bp - B))
    x_grp = jnp.pad(x_flat.reshape(bp_g, G).T, ((0, 8 - G), (0, 0)))      # (8, bp_g)

    y_grp = pl.pallas_call(
        functools.partial(mlp_kernel, num_hidden=num_hidden),
        out_shape=jax.ShapeDtypeStruct((8, bp_g), jnp.float32),
        grid_spec=pltpu.PrefetchScalarGridSpec(
            num_scalar_prefetch=0,
            grid=(ntiles,),
            in_specs=[
                pl.BlockSpec((8, tbg), lambda i: (0, i)),            # x tile (lane-dense)
                pl.BlockSpec((DP, 8), lambda i: (0, 0)),             # resident W_in slab
                pl.BlockSpec((nmid, DP, DP), lambda i: (0, 0, 0)),   # resident hidden weights
                pl.BlockSpec((DP, nbc), lambda i: (0, 0)),           # resident biases
                pl.BlockSpec((8, DP), lambda i: (0, 0)),             # resident W_out slab
            ],
            out_specs=pl.BlockSpec((8, tbg), lambda i: (0, i)),      # out tile (lane-dense)
        ),
        compiler_params=pltpu.CompilerParams(
            dimension_semantics=("parallel",)),
    )(x_grp, w0e, wmid, bcols, woute)

    y_flat = y_grp[:G].T.reshape(-1)            # undo the group packing
    return y_flat[:B].reshape(B, OUTPUT_DIM)


# ----------------------------- deterministic parameter init -------------------
def init_params(key):
    """Xavier-normal weights (gain = 5/3, Tanh branch of NN.__init__), zero biases.

    Weight shapes follow torch.nn.Linear: (out_features, in_features).
    """
    gain = 5.0 / 3.0
    dims = ([INPUT_DIM]
            + [NEURONS_PER_LAYER] * NUM_HIDDEN_LAYERS
            + [OUTPUT_DIM])
    params = []
    for i in range(NUM_HIDDEN_LAYERS + 1):
        fan_in, fan_out = dims[i], dims[i + 1]
        key, sub = jax.random.split(key)
        std = gain * math.sqrt(2.0 / (fan_in + fan_out))
        w = std * jax.random.normal(sub, (fan_out, fan_in), dtype=jnp.float32)
        b = jnp.zeros((fan_out,), dtype=jnp.float32)
        params.append((w, b))
    return tuple(params)


def nn_forward_ref(x, params):
    """Pure-JAX reference of NN.forward (Tanh activation, Batch_Norm=False)."""
    h = x
    for i, (w, b) in enumerate(params):
        h = h @ w.T + b
        if i < NUM_HIDDEN_LAYERS:
            h = jnp.tanh(h)
    return h


# TODO(synk): Batch_Norm=True branch and the Sin / Rational activation variants of NN
# are not implemented; only the default Tanh / no-batch-norm forward path is kernelized.

# ----------------------------- main -------------------------------------------
if __name__ == "__main__":
    key = jax.random.PRNGKey(0)
    pkey, xkey1, xkey2 = jax.random.split(key, 3)
    params = init_params(pkey)
    packed = prepare_params(params)   # one-time padding / block-diagonal stacking

    # small shape (single 128-lane tile, heavy padding) and a larger one
    # (2-step grid -> exercises multi-tile indexing and v7x megacore sharding)
    for B, k in ((64, xkey1), (900, xkey2)):
        x = jax.random.normal(k, (B, INPUT_DIM), dtype=jnp.float32)
        y = jax.block_until_ready(nn_forward(x, *packed))
        y_ref = nn_forward_ref(x, params)
        assert y.shape == (B, OUTPUT_DIM)
        assert jnp.allclose(y, y_ref, atol=1e-5, rtol=1e-5), \
            float(jnp.max(jnp.abs(y - y_ref)))

    print("KERNEL_OK")
</pallas_src>

<mosaic_0001>
module attributes {stable_mosaic.version = 11 : i64} {
  func.func @mlp_kernel(%arg0: i32, %arg1: memref<8x128xf32, #tpu.memory_space<vmem>>, %arg2: memref<128x8xf32, #tpu.memory_space<vmem>>, %arg3: memref<2x128x128xf32, #tpu.memory_space<vmem>>, %arg4: memref<128x8xf32, #tpu.memory_space<vmem>>, %arg5: memref<8x128xf32, #tpu.memory_space<vmem>>, %arg6: memref<8x128xf32, #tpu.memory_space<vmem>>) attributes {dimension_semantics = [#tpu.dimension_semantics<parallel>], iteration_bounds = array<i64: 1>, scalar_prefetch = 0 : i64, scratch_operands = 0 : i64, tpu.core_type = #tpu.core_type<tc>, window_params = [{transform_indices = @transform_0, window_bounds = array<i64: 8, 128>}, {pipeline_mode = #tpu.pipeline_mode<synchronous>, transform_indices = @transform_1, window_bounds = array<i64: 128, 8>}, {pipeline_mode = #tpu.pipeline_mode<synchronous>, transform_indices = @transform_2, window_bounds = array<i64: 2, 128, 128>}, {pipeline_mode = #tpu.pipeline_mode<synchronous>, transform_indices = @transform_3, window_bounds = array<i64: 128, 8>}, {pipeline_mode = #tpu.pipeline_mode<synchronous>, transform_indices = @transform_4, window_bounds = array<i64: 8, 128>}, {transform_indices = @transform_5, window_bounds = array<i64: 8, 128>}]} {
    %c0 = arith.constant 0 : index
    %c0_0 = arith.constant 0 : index
    %0 = vector.load %arg1[%c0, %c0_0] : memref<8x128xf32, #tpu.memory_space<vmem>>, vector<8x128xf32>
    %c0_1 = arith.constant 0 : index
    %c0_2 = arith.constant 0 : index
    %1 = vector.load %arg2[%c0_1, %c0_2] : memref<128x8xf32, #tpu.memory_space<vmem>>, vector<128x8xf32>
    %cst = arith.constant dense<0.000000e+00> : vector<128x128xf32>
    %2 = tpu.matmul %1, %0, %cst {dimension_numbers = #tpu.dot_dimension_numbers<[1], [0], [0], [1], [0, 0, 1, 1], [], []>} : vector<128x8xf32>, vector<8x128xf32>, vector<128x128xf32> -> vector<128x128xf32>
    %c0_3 = arith.constant 0 : index
    %c0_4 = arith.constant 0 : index
    %3 = vector.load %arg4[%c0_3, %c0_4] : memref<128x8xf32, #tpu.memory_space<vmem>>, vector<128x1xf32>
    %4 = vector.broadcast %3 : vector<128x1xf32> to vector<128x128xf32>
    %5 = arith.addf %2, %4 : vector<128x128xf32>
    %6 = math.tanh %5 : vector<128x128xf32>
    %c0_5 = arith.constant 0 : index
    %c0_6 = arith.constant 0 : index
    %c0_7 = arith.constant 0 : index
    %7 = vector.load %arg3[%c0_5, %c0_6, %c0_7] : memref<2x128x128xf32, #tpu.memory_space<vmem>>, vector<1x128x128xf32>
    %8 = vector.shape_cast %7 : vector<1x128x128xf32> to vector<128x128xf32>
    %cst_8 = arith.constant dense<0.000000e+00> : vector<128x128xf32>
    %9 = tpu.matmul %8, %6, %cst_8 {dimension_numbers = #tpu.dot_dimension_numbers<[1], [0], [0], [1], [0, 0, 1, 1], [], []>} : vector<128x128xf32>, vector<128x128xf32>, vector<128x128xf32> -> vector<128x128xf32>
    %c0_9 = arith.constant 0 : index
    %c1 = arith.constant 1 : index
    %10 = vector.load %arg4[%c0_9, %c1] : memref<128x8xf32, #tpu.memory_space<vmem>>, vector<128x1xf32>
    %11 = vector.broadcast %10 : vector<128x1xf32> to vector<128x128xf32>
    %12 = arith.addf %9, %11 : vector<128x128xf32>
    %13 = math.tanh %12 : vector<128x128xf32>
    %c1_10 = arith.constant 1 : index
    %c0_11 = arith.constant 0 : index
    %c0_12 = arith.constant 0 : index
    %14 = vector.load %arg3[%c1_10, %c0_11, %c0_12] : memref<2x128x128xf32, #tpu.memory_space<vmem>>, vector<1x128x128xf32>
    %15 = vector.shape_cast %14 : vector<1x128x128xf32> to vector<128x128xf32>
    %cst_13 = arith.constant dense<0.000000e+00> : vector<128x128xf32>
    %16 = tpu.matmul %15, %13, %cst_13 {dimension_numbers = #tpu.dot_dimension_numbers<[1], [0], [0], [1], [0, 0, 1, 1], [], []>} : vector<128x128xf32>, vector<128x128xf32>, vector<128x128xf32> -> vector<128x128xf32>
    %c0_14 = arith.constant 0 : index
    %c2 = arith.constant 2 : index
    %17 = vector.load %arg4[%c0_14, %c2] : memref<128x8xf32, #tpu.memory_space<vmem>>, vector<128x1xf32>
    %18 = vector.broadcast %17 : vector<128x1xf32> to vector<128x128xf32>
    %19 = arith.addf %16, %18 : vector<128x128xf32>
    %20 = math.tanh %19 : vector<128x128xf32>
    %c0_15 = arith.constant 0 : index
    %c0_16 = arith.constant 0 : index
    %21 = vector.load %arg5[%c0_15, %c0_16] : memref<8x128xf32, #tpu.memory_space<vmem>>, vector<8x128xf32>
    %cst_17 = arith.constant dense<0.000000e+00> : vector<8x128xf32>
    %22 = tpu.matmul %21, %20, %cst_17 {dimension_numbers = #tpu.dot_dimension_numbers<[1], [0], [0], [1], [0, 0, 1, 1], [], []>} : vector<8x128xf32>, vector<128x128xf32>, vector<8x128xf32> -> vector<8x128xf32>
    %c0_18 = arith.constant 0 : index
    %c3 = arith.constant 3 : index
    %23 = vector.load %arg4[%c0_18, %c3] : memref<128x8xf32, #tpu.memory_space<vmem>>, vector<8x1xf32>
    %24 = vector.broadcast %23 : vector<8x1xf32> to vector<8x128xf32>
    %25 = arith.addf %22, %24 : vector<8x128xf32>
    %c0_19 = arith.constant 0 : index
    %c0_20 = arith.constant 0 : index
    %26 = vector.load %arg6[%c0_19, %c0_20] : memref<8x128xf32, #tpu.memory_space<vmem>>, vector<8x128xf32>
    tpu.vector_store %arg6[%c0_19, %c0_20], %25 {strides = array<i32>} : memref<8x128xf32, #tpu.memory_space<vmem>>, vector<8x128xf32>,
    return
  }
  func.func @transform_0(%arg0: i32) -> (i32, i32) {
    %c0_i32 = arith.constant 0 : i32
    %c0_i32_0 = arith.constant 0 : i32
    return %c0_i32, %arg0 : i32, i32
  }
  func.func @transform_1(%arg0: i32) -> (i32, i32) {
    %c0_i32 = arith.constant 0 : i32
    %c0_i32_0 = arith.constant 0 : i32
    %c0_i32_1 = arith.constant 0 : i32
    return %c0_i32, %c0_i32_0 : i32, i32
  }
  func.func @transform_2(%arg0: i32) -> (i32, i32, i32) {
    %c0_i32 = arith.constant 0 : i32
    %c0_i32_0 = arith.constant 0 : i32
    %c0_i32_1 = arith.constant 0 : i32
    %c0_i32_2 = arith.constant 0 : i32
    return %c0_i32, %c0_i32_0, %c0_i32_1 : i32, i32, i32
  }
  func.func @transform_3(%arg0: i32) -> (i32, i32) {
    %c0_i32 = arith.constant 0 : i32
    %c0_i32_0 = arith.constant 0 : i32
    %c0_i32_1 = arith.constant 0 : i32
    return %c0_i32, %c0_i32_0 : i32, i32
  }
  func.func @transform_4(%arg0: i32) -> (i32, i32) {
    %c0_i32 = arith.constant 0 : i32
    %c0_i32_0 = arith.constant 0 : i32
    %c0_i32_1 = arith.constant 0 : i32
    return %c0_i32, %c0_i32_0 : i32, i32
  }
  func.func @transform_5(%arg0: i32) -> (i32, i32) {
    %c0_i32 = arith.constant 0 : i32
    %c0_i32_0 = arith.constant 0 : i32
    return %c0_i32, %arg0 : i32, i32
  }
}

</mosaic_0001>

<llo_original>
// kernel: nn_forward.1
$region0: #{nn_forward.1}
  #allocation0 [shape = 'u32[]', space=smem, size = 0x4, offset = 0x4, fixed_abs, tag = 'smem constant byte address 0x4 - core index']
  #allocation1 [shape = 'u32[72,128]{1,0:T(1,128)}', space=vmem, size = 0x9000, scoped, tag = 'internal scratch']
  %s0 = inlined_call_operand.vmem [shape: f32[8,128], index: 0, kind: input, shape index: {}]
  %s1 = inlined_call_operand.vmem [shape: f32[128,8], index: 1, kind: input, shape index: {}]
  %s2 = inlined_call_operand.vmem [shape: f32[2,128,128], index: 2, kind: input, shape index: {}]
  %s3 = inlined_call_operand.vmem [shape: f32[128,8], index: 3, kind: input, shape index: {}]
  %s4 = inlined_call_operand.vmem [shape: f32[8,128], index: 4, kind: input, shape index: {}]
  %s5 = inlined_call_operand.vmem [shape: f32[8,128], index: 5, kind: output, shape index: {}]
  %s6 = sld [smem:[#allocation0]]
  $region30: #{nn_forward.1} parent=0
    _
  %s8 = ssub.s32 1, %s6
  %s9 = scalar_select 0, %s8, %s6
  // Predicated region
  $region2: #{nn_forward.1} parent=0 // pred_check
    _
  $region3: #{nn_forward.1} parent=0 // pred_check_branch
    %11 = sbr.rel (0) target = $region5
  $region4: #{nn_forward.1} parent=0 // pred_region
    _
  $region5: #{nn_forward.1} parent=0 // pred_fallthru
    _
  // Predicated region
  $region6: #{nn_forward.1} parent=0 // pred_check
    _
  $region7: #{nn_forward.1} parent=0 // pred_check_branch
    %13 = sbr.rel (0) target = $region9
  $region8: #{nn_forward.1} parent=0 // pred_region
    _
  $region9: #{nn_forward.1} parent=0 // pred_fallthru
    _
  // Predicated region
  $region10: #{nn_forward.1} parent=0 // pred_check
    _
  $region11: #{nn_forward.1} parent=0 // pred_check_branch
    %15 = sbr.rel (0) target = $region13
  $region12: #{nn_forward.1} parent=0 // pred_region
    _
  $region13: #{nn_forward.1} parent=0 // pred_fallthru
    _
  // Predicated region
  $region14: #{nn_forward.1} parent=0 // pred_check
    _
  $region15: #{nn_forward.1} parent=0 // pred_check_branch
    %17 = sbr.rel (0) target = $region17
  $region16: #{nn_forward.1} parent=0 // pred_region
    _
  $region17: #{nn_forward.1} parent=0 // pred_fallthru
    _
  // Predicated region
  $region18: #{nn_forward.1} parent=0 // pred_check
    _
  $region19: #{nn_forward.1} parent=0 // pred_check_branch
    %19 = sbr.rel (0) target = $region21
  $region20: #{nn_forward.1} parent=0 // pred_region
    _
  $region21: #{nn_forward.1} parent=0 // pred_fallthru
    _
  %v20 = vld [vmem:[%s0] sm:$0xff]
  %v21 = vld [vmem:[%s1] sm:$0xff]
  %v22 = vld [vmem:[%s1 + $0x8] sm:$0xff]
  %v23 = vld [vmem:[%s1 + $0x10] sm:$0xff]
  %v24 = vld [vmem:[%s1 + $0x18] sm:$0xff]
  %v25 = vld [vmem:[%s1 + $0x20] sm:$0xff]
  %v26 = vld [vmem:[%s1 + $0x28] sm:$0xff]
  %v27 = vld [vmem:[%s1 + $0x30] sm:$0xff]
  %v28 = vld [vmem:[%s1 + $0x38] sm:$0xff]
  %v29 = vld [vmem:[%s1 + $0x40] sm:$0xff]
  %v30 = vld [vmem:[%s1 + $0x48] sm:$0xff]
  %v31 = vld [vmem:[%s1 + $0x50] sm:$0xff]
  %v32 = vld [vmem:[%s1 + $0x58] sm:$0xff]
  %v33 = vld [vmem:[%s1 + $0x60] sm:$0xff]
  %v34 = vld [vmem:[%s1 + $0x68] sm:$0xff]
  %v35 = vld [vmem:[%s1 + $0x70] sm:$0xff]
  %v36 = vld [vmem:[%s1 + $0x78] sm:$0xff]
  %v37 = vld [vmem:[%s3] sm:$0xff]
  %v38 = vld [vmem:[%s3 + $0x8] sm:$0xff]
  %v39 = vld [vmem:[%s3 + $0x10] sm:$0xff]
  %v40 = vld [vmem:[%s3 + $0x18] sm:$0xff]
  %v41 = vld [vmem:[%s3 + $0x20] sm:$0xff]
  %v42 = vld [vmem:[%s3 + $0x28] sm:$0xff]
  %v43 = vld [vmem:[%s3 + $0x30] sm:$0xff]
  %v44 = vld [vmem:[%s3 + $0x38] sm:$0xff]
  %v45 = vld [vmem:[%s3 + $0x40] sm:$0xff]
  %v46 = vld [vmem:[%s3 + $0x48] sm:$0xff]
  %v47 = vld [vmem:[%s3 + $0x50] sm:$0xff]
  %v48 = vld [vmem:[%s3 + $0x58] sm:$0xff]
  %v49 = vld [vmem:[%s3 + $0x60] sm:$0xff]
  %v50 = vld [vmem:[%s3 + $0x68] sm:$0xff]
  %v51 = vld [vmem:[%s3 + $0x70] sm:$0xff]
  %v52 = vld [vmem:[%s3 + $0x78] sm:$0xff]
  %54 = vset.pattern.permute.xlu0 0
  %55 = vperm.xlu0 %54, %v37
  %v56 = vpop.permute.xlu0 %55
  %59 = vset.pattern.permute.xlu0 0
  %60 = vperm.xlu0 %59, %v38
  %v61 = vpop.permute.xlu0 %60
  %64 = vset.pattern.permute.xlu0 0
  %65 = vperm.xlu0 %64, %v39
  %v66 = vpop.permute.xlu0 %65
  %69 = vset.pattern.permute.xlu0 0
  %70 = vperm.xlu0 %69, %v40
  %v71 = vpop.permute.xlu0 %70
  %74 = vset.pattern.permute.xlu0 0
  %75 = vperm.xlu0 %74, %v41
  %v76 = vpop.permute.xlu0 %75
  %79 = vset.pattern.permute.xlu0 0
  %80 = vperm.xlu0 %79, %v42
  %v81 = vpop.permute.xlu0 %80
  %84 = vset.pattern.permute.xlu0 0
  %85 = vperm.xlu0 %84, %v43
  %v86 = vpop.permute.xlu0 %85
  %89 = vset.pattern.permute.xlu0 0
  %90 = vperm.xlu0 %89, %v44
  %v91 = vpop.permute.xlu0 %90
  %94 = vset.pattern.permute.xlu0 0
  %95 = vperm.xlu0 %94, %v45
  %v96 = vpop.permute.xlu0 %95
  %99 = vset.pattern.permute.xlu0 0
  %100 = vperm.xlu0 %99, %v46
  %v101 = vpop.permute.xlu0 %100
  %104 = vset.pattern.permute.xlu0 0
  %105 = vperm.xlu0 %104, %v47
  %v106 = vpop.permute.xlu0 %105
  %109 = vset.pattern.permute.xlu0 0
  %110 = vperm.xlu0 %109, %v48
  %v111 = vpop.permute.xlu0 %110
  %114 = vset.pattern.permute.xlu0 0
  %115 = vperm.xlu0 %114, %v49
  %v116 = vpop.permute.xlu0 %115
  %119 = vset.pattern.permute.xlu0 0
  %120 = vperm.xlu0 %119, %v50
  %v121 = vpop.permute.xlu0 %120
  %124 = vset.pattern.permute.xlu0 0
  %125 = vperm.xlu0 %124, %v51
  %v126 = vpop.permute.xlu0 %125
  %129 = vset.pattern.permute.xlu0 0
  %130 = vperm.xlu0 %129, %v52
  %v131 = vpop.permute.xlu0 %130
  %vm133 = vcmask 64512
  %v135 = vsel %vm133, %v21, 0
  %v138 = vsel %vm133, %v22, 0
  %v141 = vsel %vm133, %v23, 0
  %v144 = vsel %vm133, %v24, 0
  %v147 = vsel %vm133, %v25, 0
  %v150 = vsel %vm133, %v26, 0
  %v153 = vsel %vm133, %v27, 0
  %v156 = vsel %vm133, %v28, 0
  %v159 = vsel %vm133, %v29, 0
  %v162 = vsel %vm133, %v30, 0
  %v165 = vsel %vm133, %v31, 0
  %v168 = vsel %vm133, %v32, 0
  %v171 = vsel %vm133, %v33, 0
  %v174 = vsel %vm133, %v34, 0
  %v177 = vsel %vm133, %v35, 0
  %v180 = vsel %vm133, %v36, 0
  %182 = vmatpush.msra.mxu0 0.0
  %183 = vmatpush.msra.mxu0 0.0
  %184 = vmatpush.msra.mxu0 0.0
  %185 = vmatpush.msra.mxu0 0.0
  %186 = vmatpush.msra.mxu0 0.0
  %187 = vmatpush.msra.mxu0 0.0
  %188 = vmatpush.msra.mxu0 0.0
  %189 = vmatpush.msra.mxu0 0.0
  %190 = vmatpush.msra.mxu0 0.0
  %191 = vmatpush.msra.mxu0 0.0
  %192 = vmatpush.msra.mxu0 0.0
  %193 = vmatpush.msra.mxu0 0.0
  %194 = vmatpush.msra.mxu0 0.0
  %195 = vmatpush.msra.mxu0 0.0
  %196 = vmatpush.msra.mxu0 0.0
  %197 = vmatpush.msra.mxu0 %v20
  %198 = vmatmul.f32.gmra.mxu0 %v135
  %v199 = vpop.f32.mrf.mxu0
  %v200 = vadd.f32 %v56, %v199
  %201 = vmatmul.f32.gmra.mxu0 %v138
  %v202 = vpop.f32.mrf.mxu0
  %v203 = vadd.f32 %v61, %v202
  %204 = vmatmul.f32.gmra.mxu0 %v141
  %v205 = vpop.f32.mrf.mxu0
  %v206 = vadd.f32 %v66, %v205
  %207 = vmatmul.f32.gmra.mxu0 %v144
  %v208 = vpop.f32.mrf.mxu0
  %v209 = vadd.f32 %v71, %v208
  %210 = vmatmul.f32.gmra.mxu0 %v147
  %v211 = vpop.f32.mrf.mxu0
  %v212 = vadd.f32 %v76, %v211
  %213 = vmatmul.f32.gmra.mxu0 %v150
  %v214 = vpop.f32.mrf.mxu0
  %v215 = vadd.f32 %v81, %v214
  %216 = vmatmul.f32.gmra.mxu0 %v153
  %v217 = vpop.f32.mrf.mxu0
  %v218 = vadd.f32 %v86, %v217
  %219 = vmatmul.f32.gmra.mxu0 %v156
  %v220 = vpop.f32.mrf.mxu0
  %v221 = vadd.f32 %v91, %v220
  %222 = vmatmul.f32.gmra.mxu0 %v159
  %v223 = vpop.f32.mrf.mxu0
  %v224 = vadd.f32 %v96, %v223
  %225 = vmatmul.f32.gmra.mxu0 %v162
  %v226 = vpop.f32.mrf.mxu0
  %v227 = vadd.f32 %v101, %v226
  %228 = vmatmul.f32.gmra.mxu0 %v165
  %v229 = vpop.f32.mrf.mxu0
  %v230 = vadd.f32 %v106, %v229
  %231 = vmatmul.f32.gmra.mxu0 %v168
  %v232 = vpop.f32.mrf.mxu0
  %v233 = vadd.f32 %v111, %v232
  %234 = vmatmul.f32.gmra.mxu0 %v171
  %v235 = vpop.f32.mrf.mxu0
  %v236 = vadd.f32 %v116, %v235
  %237 = vmatmul.f32.gmra.mxu0 %v174
  %v238 = vpop.f32.mrf.mxu0
  %v239 = vadd.f32 %v121, %v238
  %240 = vmatmul.f32.gmra.mxu0 %v177
  %v241 = vpop.f32.mrf.mxu0
  %v242 = vadd.f32 %v126, %v241
  %243 = vmatmul.f32.gmra.mxu0 %v180
  %v244 = vpop.f32.mrf.mxu0
  %v245 = vadd.f32 %v131, %v244
  %246 = vdwg.mxu0
  %v247 = vtanh.pop %v200
  %v248 = vtanh.pop %v203
  %v249 = vtanh.pop %v206
  %v250 = vtanh.pop %v209
  %v251 = vtanh.pop %v212
  %v252 = vtanh.pop %v215
  %v253 = vtanh.pop %v218
  %v254 = vtanh.pop %v221
  %v255 = vtanh.pop %v224
  %v256 = vtanh.pop %v227
  %v257 = vtanh.pop %v230
  %v258 = vtanh.pop %v233
  %v259 = vtanh.pop %v236
  %v260 = vtanh.pop %v239
  %v261 = vtanh.pop %v242
  %v262 = vtanh.pop %v245
  %v263 = vld [vmem:[%s2] sm:$0xff]
  %v264 = vld [vmem:[%s2 + $0x8] sm:$0xff]
  %v265 = vld [vmem:[%s2 + $0x10] sm:$0xff]
  %v266 = vld [vmem:[%s2 + $0x18] sm:$0xff]
  %v267 = vld [vmem:[%s2 + $0x20] sm:$0xff]
  %v268 = vld [vmem:[%s2 + $0x28] sm:$0xff]
  %v269 = vld [vmem:[%s2 + $0x30] sm:$0xff]
  %v270 = vld [vmem:[%s2 + $0x38] sm:$0xff]
  %v271 = vld [vmem:[%s2 + $0x40] sm:$0xff]
  %v272 = vld [vmem:[%s2 + $0x48] sm:$0xff]
  %v273 = vld [vmem:[%s2 + $0x50] sm:$0xff]
  %v274 = vld [vmem:[%s2 + $0x58] sm:$0xff]
  %v275 = vld [vmem:[%s2 + $0x60] sm:$0xff]
  %v276 = vld [vmem:[%s2 + $0x68] sm:$0xff]
  %v277 = vld [vmem:[%s2 + $0x70] sm:$0xff]
  %v278 = vld [vmem:[%s2 + $0x78] sm:$0xff]
  %279 = vset.pattern.permute.xlu0 1
  %280 = vperm.xlu0 %279, %v37
  %v281 = vpop.permute.xlu0 %280
  %283 = vset.pattern.permute.xlu0 1
  %284 = vperm.xlu0 %283, %v38
  %v285 = vpop.permute.xlu0 %284
  %287 = vset.pattern.permute.xlu0 1
  %288 = vperm.xlu0 %287, %v39
  %v289 = vpop.permute.xlu0 %288
  %291 = vset.pattern.permute.xlu0 1
  %292 = vperm.xlu0 %291, %v40
  %v293 = vpop.permute.xlu0 %292
  %295 = vset.pattern.permute.xlu0 1
  %296 = vperm.xlu0 %295, %v41
  %v297 = vpop.permute.xlu0 %296
  %299 = vset.pattern.permute.xlu0 1
  %300 = vperm.xlu0 %299, %v42
  %v301 = vpop.permute.xlu0 %300
  %303 = vset.pattern.permute.xlu0 1
  %304 = vperm.xlu0 %303, %v43
  %v305 = vpop.permute.xlu0 %304
  %307 = vset.pattern.permute.xlu0 1
  %308 = vperm.xlu0 %307, %v44
  %v309 = vpop.permute.xlu0 %308
  %311 = vset.pattern.permute.xlu0 1
  %312 = vperm.xlu0 %311, %v45
  %v313 = vpop.permute.xlu0 %312
  %315 = vset.pattern.permute.xlu0 1
  %316 = vperm.xlu0 %315, %v46
  %v317 = vpop.permute.xlu0 %316
  %319 = vset.pattern.permute.xlu0 1
  %320 = vperm.xlu0 %319, %v47
  %v321 = vpop.permute.xlu0 %320
  %323 = vset.pattern.permute.xlu0 1
  %324 = vperm.xlu0 %323, %v48
  %v325 = vpop.permute.xlu0 %324
  %327 = vset.pattern.permute.xlu0 1
  %328 = vperm.xlu0 %327, %v49
  %v329 = vpop.permute.xlu0 %328
  %331 = vset.pattern.permute.xlu0 1
  %332 = vperm.xlu0 %331, %v50
  %v333 = vpop.permute.xlu0 %332
  %335 = vset.pattern.permute.xlu0 1
  %336 = vperm.xlu0 %335, %v51
  %v337 = vpop.permute.xlu0 %336
  %339 = vset.pattern.permute.xlu0 1
  %340 = vperm.xlu0 %339, %v52
  %v341 = vpop.permute.xlu0 %340
  %343 = vmatpush.msra.mxu0 %v262
  %344 = vmatpush.msra.mxu0 %v261
  %345 = vmatpush.msra.mxu0 %v260
  %346 = vmatpush.msra.mxu0 %v259
  %347 = vmatpush.msra.mxu0 %v258
  %348 = vmatpush.msra.mxu0 %v257
  %349 = vmatpush.msra.mxu0 %v256
  %350 = vmatpush.msra.mxu0 %v255
  %351 = vmatpush.msra.mxu0 %v254
  %352 = vmatpush.msra.mxu0 %v253
  %353 = vmatpush.msra.mxu0 %v252
  %354 = vmatpush.msra.mxu0 %v251
  %355 = vmatpush.msra.mxu0 %v250
  %356 = vmatpush.msra.mxu0 %v249
  %357 = vmatpush.msra.mxu0 %v248
  %358 = vmatpush.msra.mxu0 %v247
  %359 = vmatmul.f32.gmra.mxu0 %v263
  %v360 = vpop.f32.mrf.mxu0
  %v361 = vadd.f32 %v281, %v360
  %362 = vmatmul.f32.gmra.mxu0 %v264
  %v363 = vpop.f32.mrf.mxu0
  %v364 = vadd.f32 %v285, %v363
  %365 = vmatmul.f32.gmra.mxu0 %v265
  %v366 = vpop.f32.mrf.mxu0
  %v367 = vadd.f32 %v289, %v366
  %368 = vmatmul.f32.gmra.mxu0 %v266
  %v369 = vpop.f32.mrf.mxu0
  %v370 = vadd.f32 %v293, %v369
  %371 = vmatmul.f32.gmra.mxu0 %v267
  %v372 = vpop.f32.mrf.mxu0
  %v373 = vadd.f32 %v297, %v372
  %374 = vmatmul.f32.gmra.mxu0 %v268
  %v375 = vpop.f32.mrf.mxu0
  %v376 = vadd.f32 %v301, %v375
  %377 = vmatmul.f32.gmra.mxu0 %v269
  %v378 = vpop.f32.mrf.mxu0
  %v379 = vadd.f32 %v305, %v378
  %380 = vmatmul.f32.gmra.mxu0 %v270
  %v381 = vpop.f32.mrf.mxu0
  %v382 = vadd.f32 %v309, %v381
  %383 = vmatmul.f32.gmra.mxu0 %v271
  %v384 = vpop.f32.mrf.mxu0
  %v385 = vadd.f32 %v313, %v384
  %386 = vmatmul.f32.gmra.mxu0 %v272
  %v387 = vpop.f32.mrf.mxu0
  %v388 = vadd.f32 %v317, %v387
  %389 = vmatmul.f32.gmra.mxu0 %v273
  %v390 = vpop.f32.mrf.mxu0
  %v391 = vadd.f32 %v321, %v390
  %392 = vmatmul.f32.gmra.mxu0 %v274
  %v393 = vpop.f32.mrf.mxu0
  %v394 = vadd.f32 %v325, %v393
  %395 = vmatmul.f32.gmra.mxu0 %v275
  %v396 = vpop.f32.mrf.mxu0
  %v397 = vadd.f32 %v329, %v396
  %398 = vmatmul.f32.gmra.mxu0 %v276
  %v399 = vpop.f32.mrf.mxu0
  %v400 = vadd.f32 %v333, %v399
  %401 = vmatmul.f32.gmra.mxu0 %v277
  %v402 = vpop.f32.mrf.mxu0
  %v403 = vadd.f32 %v337, %v402
  %404 = vmatmul.f32.gmra.mxu0 %v278
  %v405 = vpop.f32.mrf.mxu0
  %v406 = vadd.f32 %v341, %v405
  %407 = vdwg.mxu0
  %v408 = vtanh.pop %v361
  %v409 = vtanh.pop %v364
  %v410 = vtanh.pop %v367
  %v411 = vtanh.pop %v370
  %v412 = vtanh.pop %v373
  %v413 = vtanh.pop %v376
  %v414 = vtanh.pop %v379
  %v415 = vtanh.pop %v382
  %v416 = vtanh.pop %v385
  %v417 = vtanh.pop %v388
  %v418 = vtanh.pop %v391
  %v419 = vtanh.pop %v394
  %v420 = vtanh.pop %v397
  %v421 = vtanh.pop %v400
  %v422 = vtanh.pop %v403
  %v423 = vtanh.pop %v406
  %s424 = scalar_lea.vmem %s2, 128
  %v425 = vld [vmem:[%s424] sm:$0xff]
  %v426 = vld [vmem:[%s424 + $0x8] sm:$0xff]
  %v427 = vld [vmem:[%s424 + $0x10] sm:$0xff]
  %v428 = vld [vmem:[%s424 + $0x18] sm:$0xff]
  %v429 = vld [vmem:[%s424 + $0x20] sm:$0xff]
  %v430 = vld [vmem:[%s424 + $0x28] sm:$0xff]
  %v431 = vld [vmem:[%s424 + $0x30] sm:$0xff]
  %v432 = vld [vmem:[%s424 + $0x38] sm:$0xff]
  %v433 = vld [vmem:[%s424 + $0x40] sm:$0xff]
  %v434 = vld [vmem:[%s424 + $0x48] sm:$0xff]
  %v435 = vld [vmem:[%s424 + $0x50] sm:$0xff]
  %v436 = vld [vmem:[%s424 + $0x58] sm:$0xff]
  %v437 = vld [vmem:[%s424 + $0x60] sm:$0xff]
  %v438 = vld [vmem:[%s424 + $0x68] sm:$0xff]
  %v439 = vld [vmem:[%s424 + $0x70] sm:$0xff]
  %v440 = vld [vmem:[%s424 + $0x78] sm:$0xff]
  %441 = vset.pattern.permute.xlu0 2
  %442 = vperm.xlu0 %441, %v37
  %v443 = vpop.permute.xlu0 %442
  %445 = vset.pattern.permute.xlu0 2
  %446 = vperm.xlu0 %445, %v38
  %v447 = vpop.permute.xlu0 %446
  %449 = vset.pattern.permute.xlu0 2
  %450 = vperm.xlu0 %449, %v39
  %v451 = vpop.permute.xlu0 %450
  %453 = vset.pattern.permute.xlu0 2
  %454 = vperm.xlu0 %453, %v40
  %v455 = vpop.permute.xlu0 %454
  %457 = vset.pattern.permute.xlu0 2
  %458 = vperm.xlu0 %457, %v41
  %v459 = vpop.permute.xlu0 %458
  %461 = vset.pattern.permute.xlu0 2
  %462 = vperm.xlu0 %461, %v42
  %v463 = vpop.permute.xlu0 %462
  %465 = vset.pattern.permute.xlu0 2
  %466 = vperm.xlu0 %465, %v43
  %v467 = vpop.permute.xlu0 %466
  %469 = vset.pattern.permute.xlu0 2
  %470 = vperm.xlu0 %469, %v44
  %v471 = vpop.permute.xlu0 %470
  %473 = vset.pattern.permute.xlu0 2
  %474 = vperm.xlu0 %473, %v45
  %v475 = vpop.permute.xlu0 %474
  %477 = vset.pattern.permute.xlu0 2
  %478 = vperm.xlu0 %477, %v46
  %v479 = vpop.permute.xlu0 %478
  %481 = vset.pattern.permute.xlu0 2
  %482 = vperm.xlu0 %481, %v47
  %v483 = vpop.permute.xlu0 %482
  %485 = vset.pattern.permute.xlu0 2
  %486 = vperm.xlu0 %485, %v48
  %v487 = vpop.permute.xlu0 %486
  %489 = vset.pattern.permute.xlu0 2
  %490 = vperm.xlu0 %489, %v49
  %v491 = vpop.permute.xlu0 %490
  %493 = vset.pattern.permute.xlu0 2
  %494 = vperm.xlu0 %493, %v50
  %v495 = vpop.permute.xlu0 %494
  %497 = vset.pattern.permute.xlu0 2
  %498 = vperm.xlu0 %497, %v51
  %v499 = vpop.permute.xlu0 %498
  %501 = vset.pattern.permute.xlu0 2
  %502 = vperm.xlu0 %501, %v52
  %v503 = vpop.permute.xlu0 %502
  %505 = vmatpush.msra.mxu0 %v423
  %506 = vmatpush.msra.mxu0 %v422
  %507 = vmatpush.msra.mxu0 %v421
  %508 = vmatpush.msra.mxu0 %v420
  %509 = vmatpush.msra.mxu0 %v419
  %510 = vmatpush.msra.mxu0 %v418
  %511 = vmatpush.msra.mxu0 %v417
  %512 = vmatpush.msra.mxu0 %v416
  %513 = vmatpush.msra.mxu0 %v415
  %514 = vmatpush.msra.mxu0 %v414
  %515 = vmatpush.msra.mxu0 %v413
  %516 = vmatpush.msra.mxu0 %v412
  %517 = vmatpush.msra.mxu0 %v411
  %518 = vmatpush.msra.mxu0 %v410
  %519 = vmatpush.msra.mxu0 %v409
  %520 = vmatpush.msra.mxu0 %v408
  %521 = vmatmul.f32.gmra.mxu0 %v425
  %v522 = vpop.f32.mrf.mxu0
  %v523 = vadd.f32 %v443, %v522
  %524 = vmatmul.f32.gmra.mxu0 %v426
  %v525 = vpop.f32.mrf.mxu0
  %v526 = vadd.f32 %v447, %v525
  %527 = vmatmul.f32.gmra.mxu0 %v427
  %v528 = vpop.f32.mrf.mxu0
  %v529 = vadd.f32 %v451, %v528
  %530 = vmatmul.f32.gmra.mxu0 %v428
  %v531 = vpop.f32.mrf.mxu0
  %v532 = vadd.f32 %v455, %v531
  %533 = vmatmul.f32.gmra.mxu0 %v429
  %v534 = vpop.f32.mrf.mxu0
  %v535 = vadd.f32 %v459, %v534
  %536 = vmatmul.f32.gmra.mxu0 %v430
  %v537 = vpop.f32.mrf.mxu0
  %v538 = vadd.f32 %v463, %v537
  %539 = vmatmul.f32.gmra.mxu0 %v431
  %v540 = vpop.f32.mrf.mxu0
  %v541 = vadd.f32 %v467, %v540
  %542 = vmatmul.f32.gmra.mxu0 %v432
  %v543 = vpop.f32.mrf.mxu0
  %v544 = vadd.f32 %v471, %v543
  %545 = vmatmul.f32.gmra.mxu0 %v433
  %v546 = vpop.f32.mrf.mxu0
  %v547 = vadd.f32 %v475, %v546
  %548 = vmatmul.f32.gmra.mxu0 %v434
  %v549 = vpop.f32.mrf.mxu0
  %v550 = vadd.f32 %v479, %v549
  %551 = vmatmul.f32.gmra.mxu0 %v435
  %v552 = vpop.f32.mrf.mxu0
  %v553 = vadd.f32 %v483, %v552
  %554 = vmatmul.f32.gmra.mxu0 %v436
  %v555 = vpop.f32.mrf.mxu0
  %v556 = vadd.f32 %v487, %v555
  %557 = vmatmul.f32.gmra.mxu0 %v437
  %v558 = vpop.f32.mrf.mxu0
  %v559 = vadd.f32 %v491, %v558
  %560 = vmatmul.f32.gmra.mxu0 %v438
  %v561 = vpop.f32.mrf.mxu0
  %v562 = vadd.f32 %v495, %v561
  %563 = vmatmul.f32.gmra.mxu0 %v439
  %v564 = vpop.f32.mrf.mxu0
  %v565 = vadd.f32 %v499, %v564
  %566 = vmatmul.f32.gmra.mxu0 %v440
  %v567 = vpop.f32.mrf.mxu0
  %v568 = vadd.f32 %v503, %v567
  %569 = vdwg.mxu0
  %v570 = vtanh.pop %v523
  %v571 = vtanh.pop %v526
  %v572 = vtanh.pop %v529
  %v573 = vtanh.pop %v532
  %v574 = vtanh.pop %v535
  %v575 = vtanh.pop %v538
  %v576 = vtanh.pop %v541
  %v577 = vtanh.pop %v544
  %v578 = vtanh.pop %v547
  %v579 = vtanh.pop %v550
  %v580 = vtanh.pop %v553
  %v581 = vtanh.pop %v556
  %v582 = vtanh.pop %v559
  %v583 = vtanh.pop %v562
  %v584 = vtanh.pop %v565
  %v585 = vtanh.pop %v568
  %v586 = vld [vmem:[%s4] sm:$0xff]
  %v587 = vld [vmem:[%s3] sm:$0xff]
  %589 = vset.pattern.permute.xlu0 3
  %590 = vperm.xlu0 %589, %v587
  %v591 = vpop.permute.xlu0 %590
  %593 = vmatpush.msra.mxu0 %v585
  %594 = vmatpush.msra.mxu0 %v584
  %595 = vmatpush.msra.mxu0 %v583
  %596 = vmatpush.msra.mxu0 %v582
  %597 = vmatpush.msra.mxu0 %v581
  %598 = vmatpush.msra.mxu0 %v580
  %599 = vmatpush.msra.mxu0 %v579
  %600 = vmatpush.msra.mxu0 %v578
  %601 = vmatpush.msra.mxu0 %v577
  %602 = vmatpush.msra.mxu0 %v576
  %603 = vmatpush.msra.mxu0 %v575
  %604 = vmatpush.msra.mxu0 %v574
  %605 = vmatpush.msra.mxu0 %v573
  %606 = vmatpush.msra.mxu0 %v572
  %607 = vmatpush.msra.mxu0 %v571
  %608 = vmatpush.msra.mxu0 %v570
  %609 = vmatmul.f32.gmra.mxu0 %v586
  %v610 = vpop.f32.mrf.mxu0
  %v611 = vadd.f32 %v591, %v610
  %612 = vdwg.mxu0
  %613 = vst [vmem:[%s5] sm:$0xff] %v611
  // Predicated region
  $region22: #{nn_forward.1} parent=0 // pred_check
    _
  $region23: #{nn_forward.1} parent=0 // pred_check_branch
    %615 = sbr.rel (0) target = $region25
  $region24: #{nn_forward.1} parent=0 // pred_region
    _
  $region25: #{nn_forward.1} parent=0 // pred_fallthru
    _
  // Predicated region
  $region26: #{nn_forward.1} parent=0 // pred_check
    _
  $region27: #{nn_forward.1} parent=0 // pred_check_branch
    %617 = sbr.rel (0) target = $region29
  $region28: #{nn_forward.1} parent=0 // pred_region
    _
  $region29: #{nn_forward.1} parent=0 // pred_fallthru
    _

</llo_original>
